<compile_context>
chip_gen: v7x
topology: tpu7x:2x2x1
jax: 0.10.0
libtpu: 0.0.40
codegen_flags: <defaults>
</compile_context>

<pallas_src>
import functools

import jax
import jax.numpy as jnp
from jax.experimental import pallas as pl
from jax.experimental.pallas import tpu as pltpu


# ----------------------------------------------------------------------------
# helpers
# ----------------------------------------------------------------------------
def _round_up(v, m):
    return (v + m - 1) // m * m


def _vmem_capacity_bytes():
    """Physical VMEM per core (128 MiB on v5e/v6e, 64 MiB on v7x)."""
    try:
        cap = int(pltpu.get_tpu_info().vmem_capacity_bytes)
        if cap >= (16 << 20):
            return cap
    except Exception:
        pass
    return 64 << 20           # conservative (v7x) fallback


def _pick_lane_tile(L, O, K, vmem_budget, max_tl=2048):
    """Largest 128-multiple patch-axis tile dividing L whose *padded* VMEM
    footprint (double-buffered blocks + the f32 adjusted-kernel scratch) fits
    `vmem_budget`.  L must already be a multiple of 128."""
    K8 = _round_up(K, 8)          # sublane padding of K (x block, scratch rows)
    Klane = _round_up(K, 128)     # lane padding of K in the (O, tl, K) adj block
    O8 = _round_up(O, 8)

    def footprint(tl):
        adj_in = 2 * O * tl * Klane * 2          # bf16 adj block, 2 buffers
        x_in = 2 * K8 * tl * 4                   # f32 x block, 2 buffers
        out_b = 2 * O8 * tl * 4                  # f32 out block, 2 buffers
        scr = (O * K8 + K8) * tl * 4             # adjusted-kernel scratch (single)
        small = 2 * (K8 * 128 * 4 + O8 * 128 * 4)   # kernel^T + bias blocks
        return adj_in + x_in + out_b + scr + small

    tl = max(128, min(max_tl, L) - min(max_tl, L) % 128)
    while tl > 128 and (L % tl != 0 or footprint(tl) > vmem_budget):
        tl -= 128
    return tl


def _pick_row_tile(L, row_bytes, vmem_budget=8 << 20, max_tile=2048):
    """Row tile (multiple of 8 dividing L) for the location-MLP kernel."""
    cap = max(8, vmem_budget // max(2 * row_bytes, 1))
    cap = min(cap, max_tile, L)
    t = max(8, cap - cap % 8)
    while t > 8 and L % t != 0:
        t -= 8
    return t


# ----------------------------------------------------------------------------
# Pallas kernel 1: location MLP  (Linear -> SiLU -> Linear), tiled over L rows
# ----------------------------------------------------------------------------
def _mlp_kernel(inp_ref, w1_ref, b1_ref, w2_ref, b2_ref, out_ref):
    x = inp_ref[...]
    h = jnp.dot(x.astype(jnp.bfloat16), w1_ref[...],
                preferred_element_type=jnp.float32) + b1_ref[...]
    # SiLU: exp on the EUP, approximate reciprocal also on the EUP slot.
    h = h * pl.reciprocal(1.0 + jnp.exp(-h), approx=True)
    out = jnp.dot(h.astype(jnp.bfloat16), w2_ref[...],
                  preferred_element_type=jnp.float32) + b2_ref[...]
    out_ref[...] = out.astype(out_ref.dtype)


def run_mlp(mlp_in, w1_bf16, b1, w2_bf16, b2, out_dtype=jnp.bfloat16):
    L, in_dim = mlp_in.shape
    h2 = w1_bf16.shape[1]
    out_dim = w2_bf16.shape[1]
    tl = _pick_row_tile(L, row_bytes=(in_dim + h2 + out_dim) * 4)
    return pl.pallas_call(
        _mlp_kernel,
        out_shape=jax.ShapeDtypeStruct((L, out_dim), out_dtype),
        grid=(L // tl,),
        in_specs=[
            pl.BlockSpec((tl, in_dim), lambda i: (i, 0)),
            pl.BlockSpec((in_dim, h2), lambda i: (0, 0)),
            pl.BlockSpec((1, h2), lambda i: (0, 0)),
            pl.BlockSpec((h2, out_dim), lambda i: (0, 0)),
            pl.BlockSpec((1, out_dim), lambda i: (0, 0)),
        ],
        out_specs=pl.BlockSpec((tl, out_dim), lambda i: (i, 0)),
        compiler_params=pltpu.CompilerParams(dimension_semantics=("parallel",)),
    )(mlp_in, w1_bf16, b1.reshape(1, -1), w2_bf16, b2.reshape(1, -1))


# ----------------------------------------------------------------------------
# Pallas kernel 2: per-location adjusted-kernel contraction + bias
#   out[b, o, l] = bias[o] + sum_k x[b, k, l] * (kernel[o, k] + b * adj[o, l, k])
# adj arrives in its natural MLP-output layout (O, L, K), stored bf16.
# ----------------------------------------------------------------------------
def _patchconv_kernel(b_coef, K, K8,
                      x_ref, kern_ref, adj_ref, bias_ref, out_ref, scr_ref):
    # x_ref   : (K, TL)  f32     kern_ref : (K, O)  f32
    # adj_ref : (O, TL, K) bf16  bias_ref : (O, 1)  f32
    # out_ref : (O, TL)  f32     scr_ref  : (O*K8 + K8, TL) f32
    O, tl = out_ref.shape

    # ---- once per L-tile: build the adjusted kernel in a lane-dense scratch.
    # The batch axis is the inner, sequential grid axis, so the adj block is
    # identical for every b of this L-tile; fill only at b == 0.
    @pl.when(pl.program_id(1) == 0)
    def _fill_adjusted_kernel():
        for o in range(O):                                    # static, O is small
            slab = adj_ref[o].astype(jnp.float32).T           # (K, TL) via XLU
            kcol = kern_ref[:, o:o + 1]                       # (K, 1) f32
            scr_ref[o * K8:o * K8 + K, :] = kcol + b_coef * slab

    # ---- per (L-tile, batch): lane-dense multiply-accumulate over K.
    acc = jnp.broadcast_to(bias_ref[...], (O, tl))            # (O, TL) f32
    if K <= 256:
        for k in range(K):                                    # static unroll
            ak = scr_ref[pl.ds(k, O, stride=K8), :]           # (O, TL) adjusted col k
            xk = x_ref[k:k + 1, :]                            # (1, TL) broadcast over O
            acc = acc + ak * xk
    else:
        def body(k, a):
            ak = scr_ref[pl.ds(k, O, stride=K8), :]
            xk = x_ref[pl.ds(k, 1), :]
            return a + ak * xk
        acc = jax.lax.fori_loop(0, K, body, acc)

    out_ref[...] = acc.astype(out_ref.dtype)                  # single full-block store


def patchconv_contract(x_unf, kernel_t, adj_view, bias, b_coef):
    """x_unf (B,K,L) f32, kernel_t (K,O) f32, adj_view (O,L,K) bf16, bias (O,)
    -> (B, O, L) f32.  L must be a multiple of 128 (caller pads)."""
    B, K, L = x_unf.shape
    O = kernel_t.shape[1]
    K8 = _round_up(K, 8)

    cap = _vmem_capacity_bytes()
    vmem_limit = int(min(cap // 2, 96 << 20))                 # 64 MiB v5e/v6e, 32 MiB v7x
    tl = _pick_lane_tile(L, O, K, vmem_budget=int(vmem_limit * 0.8))

    grid = (L // tl, B)                                       # B innermost, sequential
    return pl.pallas_call(
        functools.partial(_patchconv_kernel, float(b_coef), K, K8),
        out_shape=jax.ShapeDtypeStruct((B, O, L), jnp.float32),
        grid=grid,
        in_specs=[
            pl.BlockSpec((None, K, tl), lambda lt, b: (b, 0, lt)),   # x (squeezed B)
            pl.BlockSpec((K, O), lambda lt, b: (0, 0)),              # kernel^T
            pl.BlockSpec((O, tl, K), lambda lt, b: (0, lt, 0)),      # adj, natural layout
            pl.BlockSpec((O, 1), lambda lt, b: (0, 0)),              # bias
        ],
        out_specs=pl.BlockSpec((None, O, tl), lambda lt, b: (b, 0, lt)),
        scratch_shapes=[pltpu.VMEM((O * K8 + K8, tl), jnp.float32)],
        compiler_params=pltpu.CompilerParams(
            dimension_semantics=("parallel", "arbitrary"),
            vmem_limit_bytes=vmem_limit),
    )(x_unf, kernel_t, adj_view, bias.reshape(O, 1))


# ----------------------------------------------------------------------------
# Plain-JAX glue (im2col / location grid / parameter plumbing)
# ----------------------------------------------------------------------------
def unfold_nchw(x, kh, kw, sh, sw, ph, pw):
    """nn.Unfold: (B, C, H, W) -> (B, C*kh*kw, oh*ow), same element ordering."""
    B, C, H, W = x.shape
    xp = jnp.pad(x, ((0, 0), (0, 0), (ph, ph), (pw, pw)))
    oh = (H + 2 * ph - kh) // sh + 1
    ow = (W + 2 * pw - kw) // sw + 1
    cols = []
    for i in range(kh):
        for j in range(kw):
            cols.append(xp[:, :, i:i + sh * oh:sh, j:j + sw * ow:sw])  # (B,C,oh,ow)
    patches = jnp.stack(cols, axis=2)                                  # (B,C,kh*kw,oh,ow)
    return patches.reshape(B, C * kh * kw, oh * ow)


def build_mlp_input(oh, ow, seed_vector):
    # torch.meshgrid(arange(ow), arange(oh), indexing='ij') -> (ow, oh) grids
    gx, gy = jnp.meshgrid(jnp.arange(ow), jnp.arange(oh), indexing="ij")
    locs = jnp.stack([gx / ow, gy / oh], axis=-1).reshape(-1, 2).astype(jnp.float32)
    L = locs.shape[0]
    seed_rep = jnp.broadcast_to(seed_vector[None, :], (L, seed_vector.shape[0]))
    return jnp.concatenate([locs, seed_rep], axis=-1)                  # (L, 2 + hidden)


def patch_conv_forward(x, params, kernel_size, stride, padding, b_coef):
    B, C, H, W = x.shape
    kh, kw = kernel_size
    sh, sw = stride
    ph, pw = padding
    oh = (H + 2 * ph - kh) // sh + 1
    ow = (W + 2 * pw - kw) // sw + 1
    L = oh * ow
    O, K = params["kernel"].shape

    x_unf = unfold_nchw(x, kh, kw, sh, sw, ph, pw)                     # (B, K, L) f32

    mlp_in = build_mlp_input(oh, ow, params["seed_vector"])            # (L, 2 + hidden)
    Lm = _round_up(L, 8)                                               # sublane-pad MLP rows
    if Lm != L:
        mlp_in = jnp.pad(mlp_in, ((0, Lm - L), (0, 0)))
    mlp_out = run_mlp(mlp_in,
                      params["w1"].astype(jnp.bfloat16), params["b1"],
                      params["w2"].astype(jnp.bfloat16), params["b2"])[:L]  # (L, O*K) bf16
    # torch's .view(O, L, K) is a free row-major reinterpretation -> reshape.
    adj_view = mlp_out.reshape(O, L, K)

    # Lane-dense tiling: pad the patch axis to a multiple of 128, slice after.
    Lp = _round_up(L, 128)
    if Lp != L:
        x_unf = jnp.pad(x_unf, ((0, 0), (0, 0), (0, Lp - L)))
        adj_view = jnp.pad(adj_view, ((0, 0), (0, Lp - L), (0, 0)))

    kernel_t = params["kernel"].T                                       # (K, O) f32, tiny
    out_unf = patchconv_contract(x_unf, kernel_t, adj_view,
                                 params["bias"], b_coef)                # (B, O, Lp)
    return out_unf[:, :, :L].reshape(B, O, oh, ow)


# ----------------------------------------------------------------------------
# Pure-JAX reference (mirrors the PyTorch forward) for correctness checks
# ----------------------------------------------------------------------------
def reference_forward(x, params, kernel_size, stride, padding, b_coef,
                      match_tpu_rounding=False):
    """match_tpu_rounding=True rounds the MLP matmul operands and the stored
    adjustment stream through bfloat16 exactly like the Pallas path (kernel,
    bias and x stay f32 there too), so remaining differences are pure f32
    reassociation plus the approximate EUP reciprocal in SiLU."""
    B, C, H, W = x.shape
    kh, kw = kernel_size
    sh, sw = stride
    ph, pw = padding
    oh = (H + 2 * ph - kh) // sh + 1
    ow = (W + 2 * pw - kw) // sw + 1
    L = oh * ow
    O, K = params["kernel"].shape

    def rd(v):
        return v.astype(jnp.bfloat16).astype(jnp.float32) if match_tpu_rounding else v

    x_unf = unfold_nchw(x, kh, kw, sh, sw, ph, pw)                     # (B, K, L)
    mlp_in = build_mlp_input(oh, ow, params["seed_vector"])
    h = rd(mlp_in) @ rd(params["w1"]) + params["b1"]
    h = h * (1.0 / (1.0 + jnp.exp(-h)))
    mlp_out = rd(h) @ rd(params["w2"]) + params["b2"]                  # (L, O*K)
    mlp_out = rd(mlp_out)                                              # bf16 adj stream
    patch_adj = jnp.transpose(mlp_out.reshape(O, L, K), (0, 2, 1))     # (O, K, L)
    adjusted = params["kernel"][:, :, None] + b_coef * patch_adj       # (O, K, L)
    out = jnp.einsum("okl,bkl->bol", adjusted, x_unf) + params["bias"][None, :, None]
    return out.reshape(B, O, oh, ow)


# ----------------------------------------------------------------------------
if __name__ == "__main__":
    B, C_in, H, W = 2, 4, 16, 16
    O = 8
    kernel_size = (3, 3)
    stride = (1, 1)
    padding = (1, 1)
    hidden = 16
    b_coef = 1.0
    K = C_in * kernel_size[0] * kernel_size[1]

    key = jax.random.PRNGKey(0)
    k0, k1, k2, k3, k4, k5 = jax.random.split(key, 6)

    # Deterministic synthetic parameters (shapes match the PyTorch module).
    lim_k = (6.0 / (K + O)) ** 0.5                     # xavier-uniform bound
    kernel = jax.random.uniform(k0, (O, K), minval=-lim_k, maxval=lim_k,
                                dtype=jnp.float32)
    bias = jax.random.normal(k1, (O,), dtype=jnp.float32)
    seed_vector = jax.random.normal(k2, (hidden,), dtype=jnp.float32)

    in1, out1 = 2 + hidden, hidden * 2
    lim1 = 0.1 * (6.0 / (in1 + out1)) ** 0.5
    w1 = jax.random.uniform(k3, (in1, out1), minval=-lim1, maxval=lim1,
                            dtype=jnp.float32)
    b1 = jnp.zeros((out1,), jnp.float32)

    in2, out2 = hidden * 2, O * K
    lim2 = 0.1 * (6.0 / (in2 + out2)) ** 0.5
    w2 = jax.random.uniform(k4, (in2, out2), minval=-lim2, maxval=lim2,
                            dtype=jnp.float32)
    b2 = jnp.zeros((out2,), jnp.float32)

    params = dict(kernel=kernel, bias=bias, seed_vector=seed_vector,
                  w1=w1, b1=b1, w2=w2, b2=b2)

    x = jax.random.normal(k5, (B, C_in, H, W), dtype=jnp.float32)

    out = patch_conv_forward(x, params, kernel_size, stride, padding, b_coef)
    out = jax.block_until_ready(out)

    ref_matched = reference_forward(x, params, kernel_size, stride, padding,
                                    b_coef, match_tpu_rounding=True)
    ref_exact = reference_forward(x, params, kernel_size, stride, padding,
                                  b_coef, match_tpu_rounding=False)

    assert out.shape == (B, O, 16, 16), out.shape
    # Tight check vs. a reference with identical bf16 rounding of the adj
    # stream / MLP operands: a layout, indexing or transpose bug would blow
    # far past this tolerance.
    assert bool(jnp.allclose(out, ref_matched, atol=2e-3, rtol=2e-3)), \
        "mismatch vs rounding-matched reference"
    # Loose check vs. the exact-f32 module semantics (bounds the effect of
    # the bf16 MLP operands and the bf16 adjustment stream).
    assert bool(jnp.allclose(out, ref_exact, atol=5e-2, rtol=5e-2)), \
        "mismatch vs exact f32 reference"

    print("KERNEL_OK")
</pallas_src>

<mosaic_0001>
module attributes {stable_mosaic.version = 11 : i64} {
  func.func @_mlp_kernel(%arg0: i32, %arg1: memref<256x18xf32, #tpu.memory_space<vmem>>, %arg2: memref<18x32xbf16, #tpu.memory_space<vmem>>, %arg3: memref<1x32xf32, #tpu.memory_space<vmem>>, %arg4: memref<32x288xbf16, #tpu.memory_space<vmem>>, %arg5: memref<1x288xf32, #tpu.memory_space<vmem>>, %arg6: memref<256x288xbf16, #tpu.memory_space<vmem>>) attributes {dimension_semantics = [#tpu.dimension_semantics<parallel>], iteration_bounds = array<i64: 1>, scalar_prefetch = 0 : i64, scratch_operands = 0 : i64, tpu.core_type = #tpu.core_type<tc>, window_params = [{transform_indices = @transform_0, window_bounds = array<i64: 256, 18>}, {pipeline_mode = #tpu.pipeline_mode<synchronous>, transform_indices = @transform_1, window_bounds = array<i64: 18, 32>}, {pipeline_mode = #tpu.pipeline_mode<synchronous>, transform_indices = @transform_2, window_bounds = array<i64: 1, 32>}, {pipeline_mode = #tpu.pipeline_mode<synchronous>, transform_indices = @transform_3, window_bounds = array<i64: 32, 288>}, {pipeline_mode = #tpu.pipeline_mode<synchronous>, transform_indices = @transform_4, window_bounds = array<i64: 1, 288>}, {transform_indices = @transform_5, window_bounds = array<i64: 256, 288>}]} {
    %c0 = arith.constant 0 : index
    %c0_0 = arith.constant 0 : index
    %0 = vector.load %arg1[%c0, %c0_0] : memref<256x18xf32, #tpu.memory_space<vmem>>, vector<256x18xf32>
    %1 = arith.truncf %0 : vector<256x18xf32> to vector<256x18xbf16>
    %c0_1 = arith.constant 0 : index
    %c0_2 = arith.constant 0 : index
    %2 = vector.load %arg2[%c0_1, %c0_2] : memref<18x32xbf16, #tpu.memory_space<vmem>>, vector<18x32xbf16>
    %cst = arith.constant dense<0.000000e+00> : vector<256x32xf32>
    %3 = tpu.matmul %1, %2, %cst {dimension_numbers = #tpu.dot_dimension_numbers<[1], [0], [0], [1], [0, 0, 1, 1], [], []>} : vector<256x18xbf16>, vector<18x32xbf16>, vector<256x32xf32> -> vector<256x32xf32>
    %c0_3 = arith.constant 0 : index
    %c0_4 = arith.constant 0 : index
    %4 = vector.load %arg3[%c0_3, %c0_4] : memref<1x32xf32, #tpu.memory_space<vmem>>, vector<1x32xf32>
    %5 = vector.broadcast %4 : vector<1x32xf32> to vector<256x32xf32>
    %6 = arith.addf %3, %5 : vector<256x32xf32>
    %cst_5 = arith.constant 0.000000e+00 : f32
    %7 = vector.broadcast %cst_5 : f32 to vector<256x32xf32>
    %8 = arith.subf %7, %6 : vector<256x32xf32>
    %9 = math.exp %8 : vector<256x32xf32>
    %cst_6 = arith.constant 1.000000e+00 : f32
    %10 = vector.broadcast %cst_6 : f32 to vector<256x32xf32>
    %11 = arith.addf %10, %9 : vector<256x32xf32>
    %12 = tpu.reciprocal %11 {approx = true} : vector<256x32xf32> -> vector<256x32xf32>
    %13 = arith.mulf %6, %12 : vector<256x32xf32>
    %14 = arith.truncf %13 : vector<256x32xf32> to vector<256x32xbf16>
    %c0_7 = arith.constant 0 : index
    %c0_8 = arith.constant 0 : index
    %15 = vector.load %arg4[%c0_7, %c0_8] : memref<32x288xbf16, #tpu.memory_space<vmem>>, vector<32x288xbf16>
    %cst_9 = arith.constant dense<0.000000e+00> : vector<256x288xf32>
    %16 = tpu.matmul %14, %15, %cst_9 {dimension_numbers = #tpu.dot_dimension_numbers<[1], [0], [0], [1], [0, 0, 1, 1], [], []>} : vector<256x32xbf16>, vector<32x288xbf16>, vector<256x288xf32> -> vector<256x288xf32>
    %c0_10 = arith.constant 0 : index
    %c0_11 = arith.constant 0 : index
    %17 = vector.load %arg5[%c0_10, %c0_11] : memref<1x288xf32, #tpu.memory_space<vmem>>, vector<1x288xf32>
    %18 = vector.broadcast %17 : vector<1x288xf32> to vector<256x288xf32>
    %19 = arith.addf %16, %18 : vector<256x288xf32>
    %20 = arith.truncf %19 : vector<256x288xf32> to vector<256x288xbf16>
    %c0_12 = arith.constant 0 : index
    %c0_13 = arith.constant 0 : index
    %21 = vector.load %arg6[%c0_12, %c0_13] : memref<256x288xbf16, #tpu.memory_space<vmem>>, vector<256x288xbf16>
    tpu.vector_store %arg6[%c0_12, %c0_13], %20 {strides = array<i32>} : memref<256x288xbf16, #tpu.memory_space<vmem>>, vector<256x288xbf16>,
    return
  }
  func.func @transform_0(%arg0: i32) -> (i32, i32) {
    %c0_i32 = arith.constant 0 : i32
    %c0_i32_0 = arith.constant 0 : i32
    return %arg0, %c0_i32 : i32, i32
  }
  func.func @transform_1(%arg0: i32) -> (i32, i32) {
    %c0_i32 = arith.constant 0 : i32
    %c0_i32_0 = arith.constant 0 : i32
    %c0_i32_1 = arith.constant 0 : i32
    return %c0_i32, %c0_i32_0 : i32, i32
  }
  func.func @transform_2(%arg0: i32) -> (i32, i32) {
    %c0_i32 = arith.constant 0 : i32
    %c0_i32_0 = arith.constant 0 : i32
    %c0_i32_1 = arith.constant 0 : i32
    return %c0_i32, %c0_i32_0 : i32, i32
  }
  func.func @transform_3(%arg0: i32) -> (i32, i32) {
    %c0_i32 = arith.constant 0 : i32
    %c0_i32_0 = arith.constant 0 : i32
    %c0_i32_1 = arith.constant 0 : i32
    return %c0_i32, %c0_i32_0 : i32, i32
  }
  func.func @transform_4(%arg0: i32) -> (i32, i32) {
    %c0_i32 = arith.constant 0 : i32
    %c0_i32_0 = arith.constant 0 : i32
    %c0_i32_1 = arith.constant 0 : i32
    return %c0_i32, %c0_i32_0 : i32, i32
  }
  func.func @transform_5(%arg0: i32) -> (i32, i32) {
    %c0_i32 = arith.constant 0 : i32
    %c0_i32_0 = arith.constant 0 : i32
    return %arg0, %c0_i32 : i32, i32
  }
}

</mosaic_0001>

<llo_original>
// kernel: tpu_custom_call.1
$region0: #{tpu_custom_call.1}
  #allocation0 [shape = 'u32[]', space=smem, size = 0x4, offset = 0x4, fixed_abs, tag = 'smem constant byte address 0x4 - core index']
  #allocation1 [shape = 'u32[144,128]{1,0:T(1,128)}', space=vmem, size = 0x12000, scoped, tag = 'internal scratch']
  %s0 = inlined_call_operand.vmem [shape: f32[256,18], index: 0, kind: input, shape index: {}]
  %s1 = inlined_call_operand.vmem [shape: bf16[18,32], index: 1, kind: input, shape index: {}]
  %s2 = inlined_call_operand.vmem [shape: f32[1,32], index: 2, kind: input, shape index: {}]
  %s3 = inlined_call_operand.vmem [shape: bf16[32,288], index: 3, kind: input, shape index: {}]
  %s4 = inlined_call_operand.vmem [shape: f32[1,288], index: 4, kind: input, shape index: {}]
  %s5 = inlined_call_operand.vmem [shape: bf16[256,288], index: 5, kind: output, shape index: {}]
  %s6 = sld [smem:[#allocation0]]
  $region30: #{tpu_custom_call.1} parent=0
    _
  %s8 = ssub.s32 1, %s6
  %s9 = scalar_select 0, %s8, %s6
  // Predicated region
  $region2: #{tpu_custom_call.1} parent=0 // pred_check
    _
  $region3: #{tpu_custom_call.1} parent=0 // pred_check_branch
    %11 = sbr.rel (0) target = $region5
  $region4: #{tpu_custom_call.1} parent=0 // pred_region
    _
  $region5: #{tpu_custom_call.1} parent=0 // pred_fallthru
    _
  // Predicated region
  $region6: #{tpu_custom_call.1} parent=0 // pred_check
    _
  $region7: #{tpu_custom_call.1} parent=0 // pred_check_branch
    %13 = sbr.rel (0) target = $region9
  $region8: #{tpu_custom_call.1} parent=0 // pred_region
    _
  $region9: #{tpu_custom_call.1} parent=0 // pred_fallthru
    _
  // Predicated region
  $region10: #{tpu_custom_call.1} parent=0 // pred_check
    _
  $region11: #{tpu_custom_call.1} parent=0 // pred_check_branch
    %15 = sbr.rel (0) target = $region13
  $region12: #{tpu_custom_call.1} parent=0 // pred_region
    _
  $region13: #{tpu_custom_call.1} parent=0 // pred_fallthru
    _
  // Predicated region
  $region14: #{tpu_custom_call.1} parent=0 // pred_check
    _
  $region15: #{tpu_custom_call.1} parent=0 // pred_check_branch
    %17 = sbr.rel (0) target = $region17
  $region16: #{tpu_custom_call.1} parent=0 // pred_region
    _
  $region17: #{tpu_custom_call.1} parent=0 // pred_fallthru
    _
  // Predicated region
  $region18: #{tpu_custom_call.1} parent=0 // pred_check
    _
  $region19: #{tpu_custom_call.1} parent=0 // pred_check_branch
    %19 = sbr.rel (0) target = $region21
  $region20: #{tpu_custom_call.1} parent=0 // pred_region
    _
  $region21: #{tpu_custom_call.1} parent=0 // pred_fallthru
    _
  %v21 = vld [vmem:[%s0] sm:$0xff]
  %v22 = vld [vmem:[%s0 + $0x8] sm:$0xff]
  %v23 = vld [vmem:[%s0 + $0x10] sm:$0xff]
  %v24 = vld [vmem:[%s0 + $0x18] sm:$0xff]
  %v25 = vld [vmem:[%s0 + $0x20] sm:$0xff]
  %v26 = vld [vmem:[%s0 + $0x28] sm:$0xff]
  %v27 = vld [vmem:[%s0 + $0x30] sm:$0xff]
  %v28 = vld [vmem:[%s0 + $0x38] sm:$0xff]
  %v29 = vld [vmem:[%s0 + $0x40] sm:$0xff]
  %v30 = vld [vmem:[%s0 + $0x48] sm:$0xff]
  %v31 = vld [vmem:[%s0 + $0x50] sm:$0xff]
  %v32 = vld [vmem:[%s0 + $0x58] sm:$0xff]
  %v33 = vld [vmem:[%s0 + $0x60] sm:$0xff]
  %v34 = vld [vmem:[%s0 + $0x68] sm:$0xff]
  %v35 = vld [vmem:[%s0 + $0x70] sm:$0xff]
  %v36 = vld [vmem:[%s0 + $0x78] sm:$0xff]
  %v37 = vld [vmem:[%s0 + $0x80] sm:$0xff]
  %v38 = vld [vmem:[%s0 + $0x88] sm:$0xff]
  %v39 = vld [vmem:[%s0 + $0x90] sm:$0xff]
  %v40 = vld [vmem:[%s0 + $0x98] sm:$0xff]
  %v41 = vld [vmem:[%s0 + $0xa0] sm:$0xff]
  %v42 = vld [vmem:[%s0 + $0xa8] sm:$0xff]
  %v43 = vld [vmem:[%s0 + $0xb0] sm:$0xff]
  %v44 = vld [vmem:[%s0 + $0xb8] sm:$0xff]
  %v45 = vld [vmem:[%s0 + $0xc0] sm:$0xff]
  %v46 = vld [vmem:[%s0 + $0xc8] sm:$0xff]
  %v47 = vld [vmem:[%s0 + $0xd0] sm:$0xff]
  %v48 = vld [vmem:[%s0 + $0xd8] sm:$0xff]
  %v49 = vld [vmem:[%s0 + $0xe0] sm:$0xff]
  %v50 = vld [vmem:[%s0 + $0xe8] sm:$0xff]
  %v51 = vld [vmem:[%s0 + $0xf0] sm:$0xff]
  %v52 = vld [vmem:[%s0 + $0xf8] sm:$0xff]
  %v53 = vpack.c.bf16 %v22, %v21
  %v54 = vpack.c.bf16 %v24, %v23
  %v55 = vpack.c.bf16 %v26, %v25
  %v56 = vpack.c.bf16 %v28, %v27
  %v57 = vpack.c.bf16 %v30, %v29
  %v58 = vpack.c.bf16 %v32, %v31
  %v59 = vpack.c.bf16 %v34, %v33
  %v60 = vpack.c.bf16 %v36, %v35
  %v61 = vpack.c.bf16 %v38, %v37
  %v62 = vpack.c.bf16 %v40, %v39
  %v63 = vpack.c.bf16 %v42, %v41
  %v64 = vpack.c.bf16 %v44, %v43
  %v65 = vpack.c.bf16 %v46, %v45
  %v66 = vpack.c.bf16 %v48, %v47
  %v67 = vpack.c.bf16 %v50, %v49
  %v68 = vpack.c.bf16 %v52, %v51
  %v69 = vld [vmem:[%s1] sm:$0xf]
  %v70 = vld [vmem:[%s1 + $0x4] sm:$0xf]
  %v71 = vld [vmem:[%s1 + $0x8] sm:$0x1]
  %v72 = vld [vmem:[%s2] sm:$0x1]
  %v74 = vlaneseq
  %v75 = vshrl.u32 %v74, 7
  %v76 = vsub.s32 0, %v75
  %v77 = vrot.slane %v72, %v76
  %v82 = vunpack.c.l.b16 %v69
  %v83 = vunpack.c.l.b16 %v70
  %v84 = vunpack.c.l.b16 %v71
  %v85 = vpack.c.b16 %v83, %v82
  %v86 = vpack.c.b16 %v84, %v84
  %vm88 = vcmask 146432
  %v90 = vsel %vm88, %v53, 0
  %v93 = vsel %vm88, %v54, 0
  %v96 = vsel %vm88, %v55, 0
  %v99 = vsel %vm88, %v56, 0
  %v102 = vsel %vm88, %v57, 0
  %v105 = vsel %vm88, %v58, 0
  %v108 = vsel %vm88, %v59, 0
  %v111 = vsel %vm88, %v60, 0
  %v114 = vsel %vm88, %v61, 0
  %v117 = vsel %vm88, %v62, 0
  %v120 = vsel %vm88, %v63, 0
  %v123 = vsel %vm88, %v64, 0
  %v126 = vsel %vm88, %v65, 0
  %v129 = vsel %vm88, %v66, 0
  %v132 = vsel %vm88, %v67, 0
  %v135 = vsel %vm88, %v68, 0
  %vm137 = vcmask 1040384
  %v139 = vsel %vm137, %v86, 0
  %141 = vmatprep.subr.bf16.mxu0 0
  %142 = vmatpush1.bf16.msra.mxu0 %v85
  %143 = vmatprep.subr.bf16.mxu0 0
  %144 = vmatpush1.bf16.msra.mxu0 %v139
  %145 = vmatprep.subr.bf16.mxu0 0
  %146 = vmatpush1.bf16.msra.mxu0 0
  %147 = vmatprep.subr.bf16.mxu0 0
  %148 = vmatpush1.bf16.msra.mxu0 0
  %149 = vmatprep.subr.bf16.mxu0 0
  %150 = vmatpush1.bf16.msra.mxu0 0
  %151 = vmatprep.subr.bf16.mxu0 0
  %152 = vmatpush1.bf16.msra.mxu0 0
  %153 = vmatprep.subr.bf16.mxu0 0
  %154 = vmatpush1.bf16.msra.mxu0 0
  %155 = vmatprep.subr.bf16.mxu0 0
  %156 = vmatpush1.bf16.msra.mxu0 0
  %157 = vmatprep.subr.bf16.mxu0 0
  %158 = vmatpush1.bf16.msra.mxu0 0
  %159 = vmatprep.subr.bf16.mxu0 0
  %160 = vmatpush1.bf16.msra.mxu0 0
  %161 = vmatprep.subr.bf16.mxu0 0
  %162 = vmatpush1.bf16.msra.mxu0 0
  %163 = vmatprep.subr.bf16.mxu0 0
  %164 = vmatpush1.bf16.msra.mxu0 0
  %165 = vmatprep.subr.bf16.mxu0 0
  %166 = vmatpush1.bf16.msra.mxu0 0
  %167 = vmatprep.subr.bf16.mxu0 0
  %168 = vmatpush1.bf16.msra.mxu0 0
  %169 = vmatprep.subr.bf16.mxu0 0
  %170 = vmatpush1.bf16.msra.mxu0 0
  %171 = vmatprep.subr.bf16.mxu0 0
  %172 = vmatpush1.bf16.msra.mxu0 0
  %173 = vmatprep.mubr.bf16.mxu0 0
  %174 = vmatmul.mubr.bf16.gmra.mrb[0].mxu0 %v90
  %v175 = vpop.f32.mrb[0].mxu0
  %v176 = vadd.f32 %v77, %v175
  %v177 = vpop.f32.mrb[0].mxu0
  %v178 = vpop.f32.mrb[0].mxu0
  %v179 = vadd.f32 %v77, %v178
  %v180 = vpop.f32.mrb[0].mxu0
  %181 = vmatprep.mubr.bf16.mxu0 0
  %182 = vmatmul.mubr.bf16.gmra.mrb[0].mxu0 %v93
  %v183 = vpop.f32.mrb[0].mxu0
  %v184 = vadd.f32 %v77, %v183
  %v185 = vpop.f32.mrb[0].mxu0
  %v186 = vpop.f32.mrb[0].mxu0
  %v187 = vadd.f32 %v77, %v186
  %v188 = vpop.f32.mrb[0].mxu0
  %189 = vmatprep.mubr.bf16.mxu0 0
  %190 = vmatmul.mubr.bf16.gmra.mrb[0].mxu0 %v96
  %v191 = vpop.f32.mrb[0].mxu0
  %v192 = vadd.f32 %v77, %v191
  %v193 = vpop.f32.mrb[0].mxu0
  %v194 = vpop.f32.mrb[0].mxu0
  %v195 = vadd.f32 %v77, %v194
  %v196 = vpop.f32.mrb[0].mxu0
  %197 = vmatprep.mubr.bf16.mxu0 0
  %198 = vmatmul.mubr.bf16.gmra.mrb[0].mxu0 %v99
  %v199 = vpop.f32.mrb[0].mxu0
  %v200 = vadd.f32 %v77, %v199
  %v201 = vpop.f32.mrb[0].mxu0
  %v202 = vpop.f32.mrb[0].mxu0
  %v203 = vadd.f32 %v77, %v202
  %v204 = vpop.f32.mrb[0].mxu0
  %205 = vmatprep.mubr.bf16.mxu0 0
  %206 = vmatmul.mubr.bf16.gmra.mrb[0].mxu0 %v102
  %v207 = vpop.f32.mrb[0].mxu0
  %v208 = vadd.f32 %v77, %v207
  %v209 = vpop.f32.mrb[0].mxu0
  %v210 = vpop.f32.mrb[0].mxu0
  %v211 = vadd.f32 %v77, %v210
  %v212 = vpop.f32.mrb[0].mxu0
  %213 = vmatprep.mubr.bf16.mxu0 0
  %214 = vmatmul.mubr.bf16.gmra.mrb[0].mxu0 %v105
  %v215 = vpop.f32.mrb[0].mxu0
  %v216 = vadd.f32 %v77, %v215
  %v217 = vpop.f32.mrb[0].mxu0
  %v218 = vpop.f32.mrb[0].mxu0
  %v219 = vadd.f32 %v77, %v218
  %v220 = vpop.f32.mrb[0].mxu0
  %221 = vmatprep.mubr.bf16.mxu0 0
  %222 = vmatmul.mubr.bf16.gmra.mrb[0].mxu0 %v108
  %v223 = vpop.f32.mrb[0].mxu0
  %v224 = vadd.f32 %v77, %v223
  %v225 = vpop.f32.mrb[0].mxu0
  %v226 = vpop.f32.mrb[0].mxu0
  %v227 = vadd.f32 %v77, %v226
  %v228 = vpop.f32.mrb[0].mxu0
  %229 = vmatprep.mubr.bf16.mxu0 0
  %230 = vmatmul.mubr.bf16.gmra.mrb[0].mxu0 %v111
  %v231 = vpop.f32.mrb[0].mxu0
  %v232 = vadd.f32 %v77, %v231
  %v233 = vpop.f32.mrb[0].mxu0
  %v234 = vpop.f32.mrb[0].mxu0
  %v235 = vadd.f32 %v77, %v234
  %v236 = vpop.f32.mrb[0].mxu0
  %237 = vmatprep.mubr.bf16.mxu0 0
  %238 = vmatmul.mubr.bf16.gmra.mrb[0].mxu0 %v114
  %v239 = vpop.f32.mrb[0].mxu0
  %v240 = vadd.f32 %v77, %v239
  %v241 = vpop.f32.mrb[0].mxu0
  %v242 = vpop.f32.mrb[0].mxu0
  %v243 = vadd.f32 %v77, %v242
  %v244 = vpop.f32.mrb[0].mxu0
  %245 = vmatprep.mubr.bf16.mxu0 0
  %246 = vmatmul.mubr.bf16.gmra.mrb[0].mxu0 %v117
  %v247 = vpop.f32.mrb[0].mxu0
  %v248 = vadd.f32 %v77, %v247
  %v249 = vpop.f32.mrb[0].mxu0
  %v250 = vpop.f32.mrb[0].mxu0
  %v251 = vadd.f32 %v77, %v250
  %v252 = vpop.f32.mrb[0].mxu0
  %253 = vmatprep.mubr.bf16.mxu0 0
  %254 = vmatmul.mubr.bf16.gmra.mrb[0].mxu0 %v120
  %v255 = vpop.f32.mrb[0].mxu0
  %v256 = vadd.f32 %v77, %v255
  %v257 = vpop.f32.mrb[0].mxu0
  %v258 = vpop.f32.mrb[0].mxu0
  %v259 = vadd.f32 %v77, %v258
  %v260 = vpop.f32.mrb[0].mxu0
  %261 = vmatprep.mubr.bf16.mxu0 0
  %262 = vmatmul.mubr.bf16.gmra.mrb[0].mxu0 %v123
  %v263 = vpop.f32.mrb[0].mxu0
  %v264 = vadd.f32 %v77, %v263
  %v265 = vpop.f32.mrb[0].mxu0
  %v266 = vpop.f32.mrb[0].mxu0
  %v267 = vadd.f32 %v77, %v266
  %v268 = vpop.f32.mrb[0].mxu0
  %269 = vmatprep.mubr.bf16.mxu0 0
  %270 = vmatmul.mubr.bf16.gmra.mrb[0].mxu0 %v126
  %v271 = vpop.f32.mrb[0].mxu0
  %v272 = vadd.f32 %v77, %v271
  %v273 = vpop.f32.mrb[0].mxu0
  %v274 = vpop.f32.mrb[0].mxu0
  %v275 = vadd.f32 %v77, %v274
  %v276 = vpop.f32.mrb[0].mxu0
  %277 = vmatprep.mubr.bf16.mxu0 0
  %278 = vmatmul.mubr.bf16.gmra.mrb[0].mxu0 %v129
  %v279 = vpop.f32.mrb[0].mxu0
  %v280 = vadd.f32 %v77, %v279
  %v281 = vpop.f32.mrb[0].mxu0
  %v282 = vpop.f32.mrb[0].mxu0
  %v283 = vadd.f32 %v77, %v282
  %v284 = vpop.f32.mrb[0].mxu0
  %285 = vmatprep.mubr.bf16.mxu0 0
  %286 = vmatmul.mubr.bf16.gmra.mrb[0].mxu0 %v132
  %v287 = vpop.f32.mrb[0].mxu0
  %v288 = vadd.f32 %v77, %v287
  %v289 = vpop.f32.mrb[0].mxu0
  %v290 = vpop.f32.mrb[0].mxu0
  %v291 = vadd.f32 %v77, %v290
  %v292 = vpop.f32.mrb[0].mxu0
  %293 = vmatprep.mubr.bf16.mxu0 0
  %294 = vmatmul.mubr.bf16.gmra.mrb[0].mxu0 %v135
  %v295 = vpop.f32.mrb[0].mxu0
  %v296 = vadd.f32 %v77, %v295
  %v297 = vpop.f32.mrb[0].mxu0
  %v298 = vpop.f32.mrb[0].mxu0
  %v299 = vadd.f32 %v77, %v298
  %v300 = vpop.f32.mrb[0].mxu0
  %301 = vdwg.mxu0
  %v302 = vsub.f32 0.0, %v176
  %v303 = vsub.f32 0.0, %v179
  %v304 = vsub.f32 0.0, %v184
  %v305 = vsub.f32 0.0, %v187
  %v306 = vsub.f32 0.0, %v192
  %v307 = vsub.f32 0.0, %v195
  %v308 = vsub.f32 0.0, %v200
  %v309 = vsub.f32 0.0, %v203
  %v310 = vsub.f32 0.0, %v208
  %v311 = vsub.f32 0.0, %v211
  %v312 = vsub.f32 0.0, %v216
  %v313 = vsub.f32 0.0, %v219
  %v314 = vsub.f32 0.0, %v224
  %v315 = vsub.f32 0.0, %v227
  %v316 = vsub.f32 0.0, %v232
  %v317 = vsub.f32 0.0, %v235
  %v318 = vsub.f32 0.0, %v240
  %v319 = vsub.f32 0.0, %v243
  %v320 = vsub.f32 0.0, %v248
  %v321 = vsub.f32 0.0, %v251
  %v322 = vsub.f32 0.0, %v256
  %v323 = vsub.f32 0.0, %v259
  %v324 = vsub.f32 0.0, %v264
  %v325 = vsub.f32 0.0, %v267
  %v326 = vsub.f32 0.0, %v272
  %v327 = vsub.f32 0.0, %v275
  %v328 = vsub.f32 0.0, %v280
  %v329 = vsub.f32 0.0, %v283
  %v330 = vsub.f32 0.0, %v288
  %v331 = vsub.f32 0.0, %v291
  %v332 = vsub.f32 0.0, %v296
  %v333 = vsub.f32 0.0, %v299
  %v334 = vmul.f32 %v302, 1.442695
  %v335 = vpow.pop %v334
  %v336 = vmul.f32 %v303, 1.442695
  %v337 = vpow.pop %v336
  %v338 = vmul.f32 %v304, 1.442695
  %v339 = vpow.pop %v338
  %v340 = vmul.f32 %v305, 1.442695
  %v341 = vpow.pop %v340
  %v342 = vmul.f32 %v306, 1.442695
  %v343 = vpow.pop %v342
  %v344 = vmul.f32 %v307, 1.442695
  %v345 = vpow.pop %v344
  %v346 = vmul.f32 %v308, 1.442695
  %v347 = vpow.pop %v346
  %v348 = vmul.f32 %v309, 1.442695
  %v349 = vpow.pop %v348
  %v350 = vmul.f32 %v310, 1.442695
  %v351 = vpow.pop %v350
  %v352 = vmul.f32 %v311, 1.442695
  %v353 = vpow.pop %v352
  %v354 = vmul.f32 %v312, 1.442695
  %v355 = vpow.pop %v354
  %v356 = vmul.f32 %v313, 1.442695
  %v357 = vpow.pop %v356
  %v358 = vmul.f32 %v314, 1.442695
  %v359 = vpow.pop %v358
  %v360 = vmul.f32 %v315, 1.442695
  %v361 = vpow.pop %v360
  %v362 = vmul.f32 %v316, 1.442695
  %v363 = vpow.pop %v362
  %v364 = vmul.f32 %v317, 1.442695
  %v365 = vpow.pop %v364
  %v366 = vmul.f32 %v318, 1.442695
  %v367 = vpow.pop %v366
  %v368 = vmul.f32 %v319, 1.442695
  %v369 = vpow.pop %v368
  %v370 = vmul.f32 %v320, 1.442695
  %v371 = vpow.pop %v370
  %v372 = vmul.f32 %v321, 1.442695
  %v373 = vpow.pop %v372
  %v374 = vmul.f32 %v322, 1.442695
  %v375 = vpow.pop %v374
  %v376 = vmul.f32 %v323, 1.442695
  %v377 = vpow.pop %v376
  %v378 = vmul.f32 %v324, 1.442695
  %v379 = vpow.pop %v378
  %v380 = vmul.f32 %v325, 1.442695
  %v381 = vpow.pop %v380
  %v382 = vmul.f32 %v326, 1.442695
  %v383 = vpow.pop %v382
  %v384 = vmul.f32 %v327, 1.442695
  %v385 = vpow.pop %v384
  %v386 = vmul.f32 %v328, 1.442695
  %v387 = vpow.pop %v386
  %v388 = vmul.f32 %v329, 1.442695
  %v389 = vpow.pop %v388
  %v390 = vmul.f32 %v330, 1.442695
  %v391 = vpow.pop %v390
  %v392 = vmul.f32 %v331, 1.442695
  %v393 = vpow.pop %v392
  %v394 = vmul.f32 %v332, 1.442695
  %v395 = vpow.pop %v394
  %v396 = vmul.f32 %v333, 1.442695
  %v397 = vpow.pop %v396
  %v398 = vadd.f32 %v335, 1.0
  %v399 = vadd.f32 %v337, 1.0
  %v400 = vadd.f32 %v339, 1.0
  %v401 = vadd.f32 %v341, 1.0
  %v402 = vadd.f32 %v343, 1.0
  %v403 = vadd.f32 %v345, 1.0
  %v404 = vadd.f32 %v347, 1.0
  %v405 = vadd.f32 %v349, 1.0
  %v406 = vadd.f32 %v351, 1.0
  %v407 = vadd.f32 %v353, 1.0
  %v408 = vadd.f32 %v355, 1.0
  %v409 = vadd.f32 %v357, 1.0
  %v410 = vadd.f32 %v359, 1.0
  %v411 = vadd.f32 %v361, 1.0
  %v412 = vadd.f32 %v363, 1.0
  %v413 = vadd.f32 %v365, 1.0
  %v414 = vadd.f32 %v367, 1.0
  %v415 = vadd.f32 %v369, 1.0
  %v416 = vadd.f32 %v371, 1.0
  %v417 = vadd.f32 %v373, 1.0
  %v418 = vadd.f32 %v375, 1.0
  %v419 = vadd.f32 %v377, 1.0
  %v420 = vadd.f32 %v379, 1.0
  %v421 = vadd.f32 %v381, 1.0
  %v422 = vadd.f32 %v383, 1.0
  %v423 = vadd.f32 %v385, 1.0
  %v424 = vadd.f32 %v387, 1.0
  %v425 = vadd.f32 %v389, 1.0
  %v426 = vadd.f32 %v391, 1.0
  %v427 = vadd.f32 %v393, 1.0
  %v428 = vadd.f32 %v395, 1.0
  %v429 = vadd.f32 %v397, 1.0
  %v430 = vrcp.pop %v398
  %v431 = vrcp.pop %v399
  %v432 = vrcp.pop %v400
  %v433 = vrcp.pop %v401
  %v434 = vrcp.pop %v402
  %v435 = vrcp.pop %v403
  %v436 = vrcp.pop %v404
  %v437 = vrcp.pop %v405
  %v438 = vrcp.pop %v406
  %v439 = vrcp.pop %v407
  %v440 = vrcp.pop %v408
  %v441 = vrcp.pop %v409
  %v442 = vrcp.pop %v410
  %v443 = vrcp.pop %v411
  %v444 = vrcp.pop %v412
  %v445 = vrcp.pop %v413
  %v446 = vrcp.pop %v414
  %v447 = vrcp.pop %v415
  %v448 = vrcp.pop %v416
  %v449 = vrcp.pop %v417
  %v450 = vrcp.pop %v418
  %v451 = vrcp.pop %v419
  %v452 = vrcp.pop %v420
  %v453 = vrcp.pop %v421
  %v454 = vrcp.pop %v422
  %v455 = vrcp.pop %v423
  %v456 = vrcp.pop %v424
  %v457 = vrcp.pop %v425
  %v458 = vrcp.pop %v426
  %v459 = vrcp.pop %v427
  %v460 = vrcp.pop %v428
  %v461 = vrcp.pop %v429
  %v462 = vmul.f32 %v176, %v430
  %v463 = vmul.f32 %v179, %v431
  %v464 = vmul.f32 %v184, %v432
  %v465 = vmul.f32 %v187, %v433
  %v466 = vmul.f32 %v192, %v434
  %v467 = vmul.f32 %v195, %v435
  %v468 = vmul.f32 %v200, %v436
  %v469 = vmul.f32 %v203, %v437
  %v470 = vmul.f32 %v208, %v438
  %v471 = vmul.f32 %v211, %v439
  %v472 = vmul.f32 %v216, %v440
  %v473 = vmul.f32 %v219, %v441
  %v474 = vmul.f32 %v224, %v442
  %v475 = vmul.f32 %v227, %v443
  %v476 = vmul.f32 %v232, %v444
  %v477 = vmul.f32 %v235, %v445
  %v478 = vmul.f32 %v240, %v446
  %v479 = vmul.f32 %v243, %v447
  %v480 = vmul.f32 %v248, %v448
  %v481 = vmul.f32 %v251, %v449
  %v482 = vmul.f32 %v256, %v450
  %v483 = vmul.f32 %v259, %v451
  %v484 = vmul.f32 %v264, %v452
  %v485 = vmul.f32 %v267, %v453
  %v486 = vmul.f32 %v272, %v454
  %v487 = vmul.f32 %v275, %v455
  %v488 = vmul.f32 %v280, %v456
  %v489 = vmul.f32 %v283, %v457
  %v490 = vmul.f32 %v288, %v458
  %v491 = vmul.f32 %v291, %v459
  %v492 = vmul.f32 %v296, %v460
  %v493 = vmul.f32 %v299, %v461
  %v494 = vpack.c.bf16 %v463, %v462
  %v495 = vpack.c.bf16 %v465, %v464
  %v496 = vpack.c.bf16 %v467, %v466
  %v497 = vpack.c.bf16 %v469, %v468
  %v498 = vpack.c.bf16 %v471, %v470
  %v499 = vpack.c.bf16 %v473, %v472
  %v500 = vpack.c.bf16 %v475, %v474
  %v501 = vpack.c.bf16 %v477, %v476
  %v502 = vpack.c.bf16 %v479, %v478
  %v503 = vpack.c.bf16 %v481, %v480
  %v504 = vpack.c.bf16 %v483, %v482
  %v505 = vpack.c.bf16 %v485, %v484
  %v506 = vpack.c.bf16 %v487, %v486
  %v507 = vpack.c.bf16 %v489, %v488
  %v508 = vpack.c.bf16 %v491, %v490
  %v509 = vpack.c.bf16 %v493, %v492
  %v510 = vld [vmem:[%s3] sm:$0xff]
  %v511 = vld [vmem:[%s3 + $0x8] sm:$0xf]
  %v512 = vld [vmem:[%s3 + $0xc] sm:$0xff]
  %v513 = vld [vmem:[%s3 + $0x14] sm:$0xf]
  %v514 = vld [vmem:[%s3 + $0x18] sm:$0xff]
  %v515 = vld [vmem:[%s3 + $0x20] sm:$0xf]
  %v516 = vld [vmem:[%s3 + $0x24] sm:$0xff]
  %v517 = vld [vmem:[%s3 + $0x2c] sm:$0xf]
  %v518 = vld [vmem:[%s4] sm:$0x7]
  %v520 = vlaneseq
  %v521 = vshrl.u32 %v520, 7
  %v522 = vsub.s32 0, %v521
  %v523 = vrot.slane %v518, %v522
  %v524 = vlaneseq
  %v525 = vshrl.u32 %v524, 7
  %v526 = vsub.s32 1, %v525
  %v527 = vrot.slane %v518, %v526
  %v528 = vlaneseq
  %v529 = vshrl.u32 %v528, 7
  %v530 = vsub.s32 2, %v529
  %v531 = vrot.slane %v518, %v530
  %v543 = vunpack.c.l.b16 %v510
  %v544 = vunpack.c.h.b16 %v510
  %v545 = vunpack.c.l.b16 %v511
  %v546 = vunpack.c.l.b16 %v512
  %v547 = vunpack.c.h.b16 %v512
  %v548 = vunpack.c.l.b16 %v513
  %v549 = vunpack.c.l.b16 %v514
  %v550 = vunpack.c.h.b16 %v514
  %v551 = vunpack.c.l.b16 %v515
  %v552 = vunpack.c.l.b16 %v516
  %v553 = vunpack.c.h.b16 %v516
  %v554 = vunpack.c.l.b16 %v517
  %v555 = vpack.c.b16 %v546, %v543
  %v556 = vpack.c.b16 %v547, %v544
  %v557 = vpack.c.b16 %v548, %v545
  %v558 = vpack.c.b16 %v552, %v549
  %v559 = vpack.c.b16 %v553, %v550
  %v560 = vpack.c.b16 %v554, %v551
  %vm567 = vcmask 261120
  %v569 = vsel %vm567, %v494, 0
  %v572 = vsel %vm567, %v495, 0
  %v575 = vsel %vm567, %v496, 0
  %v578 = vsel %vm567, %v497, 0
  %v581 = vsel %vm567, %v498, 0
  %v584 = vsel %vm567, %v499, 0
  %v587 = vsel %vm567, %v500, 0
  %v590 = vsel %vm567, %v501, 0
  %v593 = vsel %vm567, %v502, 0
  %v596 = vsel %vm567, %v503, 0
  %v599 = vsel %vm567, %v504, 0
  %v602 = vsel %vm567, %v505, 0
  %v605 = vsel %vm567, %v506, 0
  %v608 = vsel %vm567, %v507, 0
  %v611 = vsel %vm567, %v508, 0
  %v614 = vsel %vm567, %v509, 0
  %616 = vmatprep.subr.bf16.mxu0 %v556
  %617 = vmatpush1.bf16.msra.mxu0 %v555
  %618 = vmatprep.subr.bf16.mxu0 %v559
  %619 = vmatpush1.bf16.msra.mxu0 %v558
  %620 = vmatprep.subr.bf16.mxu0 0
  %621 = vmatpush1.bf16.msra.mxu0 0
  %622 = vmatprep.subr.bf16.mxu0 0
  %623 = vmatpush1.bf16.msra.mxu0 0
  %624 = vmatprep.subr.bf16.mxu0 0
  %625 = vmatpush1.bf16.msra.mxu0 0
  %626 = vmatprep.subr.bf16.mxu0 0
  %627 = vmatpush1.bf16.msra.mxu0 0
  %628 = vmatprep.subr.bf16.mxu0 0
  %629 = vmatpush1.bf16.msra.mxu0 0
  %630 = vmatprep.subr.bf16.mxu0 0
  %631 = vmatpush1.bf16.msra.mxu0 0
  %632 = vmatprep.subr.bf16.mxu0 0
  %633 = vmatpush1.bf16.msra.mxu0 0
  %634 = vmatprep.subr.bf16.mxu0 0
  %635 = vmatpush1.bf16.msra.mxu0 0
  %636 = vmatprep.subr.bf16.mxu0 0
  %637 = vmatpush1.bf16.msra.mxu0 0
  %638 = vmatprep.subr.bf16.mxu0 0
  %639 = vmatpush1.bf16.msra.mxu0 0
  %640 = vmatprep.subr.bf16.mxu0 0
  %641 = vmatpush1.bf16.msra.mxu0 0
  %642 = vmatprep.subr.bf16.mxu0 0
  %643 = vmatpush1.bf16.msra.mxu0 0
  %644 = vmatprep.subr.bf16.mxu0 0
  %645 = vmatpush1.bf16.msra.mxu0 0
  %646 = vmatprep.subr.bf16.mxu0 0
  %647 = vmatpush1.bf16.msra.mxu0 0
  %648 = vmatprep.mubr.bf16.mxu0 0
  %649 = vmatmul.mubr.bf16.gmra.mrb[0].mxu0 %v569
  %v650 = vpop.f32.mrb[0].mxu0
  %v651 = vadd.f32 %v523, %v650
  %v652 = vpop.f32.mrb[0].mxu0
  %v653 = vadd.f32 %v527, %v652
  %v654 = vpop.f32.mrb[0].mxu0
  %v655 = vadd.f32 %v523, %v654
  %v656 = vpop.f32.mrb[0].mxu0
  %v657 = vadd.f32 %v527, %v656
  %658 = vmatprep.mubr.bf16.mxu0 0
  %659 = vmatmul.mubr.bf16.gmra.mrb[0].mxu0 %v572
  %v660 = vpop.f32.mrb[0].mxu0
  %v661 = vadd.f32 %v523, %v660
  %v662 = vpop.f32.mrb[0].mxu0
  %v663 = vadd.f32 %v527, %v662
  %v664 = vpop.f32.mrb[0].mxu0
  %v665 = vadd.f32 %v523, %v664
  %v666 = vpop.f32.mrb[0].mxu0
  %v667 = vadd.f32 %v527, %v666
  %668 = vmatprep.mubr.bf16.mxu0 0
  %669 = vmatmul.mubr.bf16.gmra.mrb[0].mxu0 %v575
  %v670 = vpop.f32.mrb[0].mxu0
  %v671 = vadd.f32 %v523, %v670
  %v672 = vpop.f32.mrb[0].mxu0
  %v673 = vadd.f32 %v527, %v672
  %v674 = vpop.f32.mrb[0].mxu0
  %v675 = vadd.f32 %v523, %v674
  %v676 = vpop.f32.mrb[0].mxu0
  %v677 = vadd.f32 %v527, %v676
  %678 = vmatprep.mubr.bf16.mxu0 0
  %679 = vmatmul.mubr.bf16.gmra.mrb[0].mxu0 %v578
  %v680 = vpop.f32.mrb[0].mxu0
  %v681 = vadd.f32 %v523, %v680
  %v682 = vpop.f32.mrb[0].mxu0
  %v683 = vadd.f32 %v527, %v682
  %v684 = vpop.f32.mrb[0].mxu0
  %v685 = vadd.f32 %v523, %v684
  %v686 = vpop.f32.mrb[0].mxu0
  %v687 = vadd.f32 %v527, %v686
  %688 = vmatprep.mubr.bf16.mxu0 0
  %689 = vmatmul.mubr.bf16.gmra.mrb[0].mxu0 %v581
  %v690 = vpop.f32.mrb[0].mxu0
  %v691 = vadd.f32 %v523, %v690
  %v692 = vpop.f32.mrb[0].mxu0
  %v693 = vadd.f32 %v527, %v692
  %v694 = vpop.f32.mrb[0].mxu0
  %v695 = vadd.f32 %v523, %v694
  %v696 = vpop.f32.mrb[0].mxu0
  %v697 = vadd.f32 %v527, %v696
  %698 = vmatprep.mubr.bf16.mxu0 0
  %699 = vmatmul.mubr.bf16.gmra.mrb[0].mxu0 %v584
  %v700 = vpop.f32.mrb[0].mxu0
  %v701 = vadd.f32 %v523, %v700
  %v702 = vpop.f32.mrb[0].mxu0
  %v703 = vadd.f32 %v527, %v702
  %v704 = vpop.f32.mrb[0].mxu0
  %v705 = vadd.f32 %v523, %v704
  %v706 = vpop.f32.mrb[0].mxu0
  %v707 = vadd.f32 %v527, %v706
  %708 = vmatprep.mubr.bf16.mxu0 0
  %709 = vmatmul.mubr.bf16.gmra.mrb[0].mxu0 %v587
  %v710 = vpop.f32.mrb[0].mxu0
  %v711 = vadd.f32 %v523, %v710
  %v712 = vpop.f32.mrb[0].mxu0
  %v713 = vadd.f32 %v527, %v712
  %v714 = vpop.f32.mrb[0].mxu0
  %v715 = vadd.f32 %v523, %v714
  %v716 = vpop.f32.mrb[0].mxu0
  %v717 = vadd.f32 %v527, %v716
  %718 = vmatprep.mubr.bf16.mxu0 0
  %719 = vmatmul.mubr.bf16.gmra.mrb[0].mxu0 %v590
  %v720 = vpop.f32.mrb[0].mxu0
  %v721 = vadd.f32 %v523, %v720
  %v722 = vpop.f32.mrb[0].mxu0
  %v723 = vadd.f32 %v527, %v722
  %v724 = vpop.f32.mrb[0].mxu0
  %v725 = vadd.f32 %v523, %v724
  %v726 = vpop.f32.mrb[0].mxu0
  %v727 = vadd.f32 %v527, %v726
  %728 = vmatprep.mubr.bf16.mxu0 0
  %729 = vmatmul.mubr.bf16.gmra.mrb[0].mxu0 %v593
  %v730 = vpop.f32.mrb[0].mxu0
  %v731 = vadd.f32 %v523, %v730
  %v732 = vpop.f32.mrb[0].mxu0
  %v733 = vadd.f32 %v527, %v732
  %v734 = vpop.f32.mrb[0].mxu0
  %v735 = vadd.f32 %v523, %v734
  %v736 = vpop.f32.mrb[0].mxu0
  %v737 = vadd.f32 %v527, %v736
  %738 = vmatprep.mubr.bf16.mxu0 0
  %739 = vmatmul.mubr.bf16.gmra.mrb[0].mxu0 %v596
  %v740 = vpop.f32.mrb[0].mxu0
  %v741 = vadd.f32 %v523, %v740
  %v742 = vpop.f32.mrb[0].mxu0
  %v743 = vadd.f32 %v527, %v742
  %v744 = vpop.f32.mrb[0].mxu0
  %v745 = vadd.f32 %v523, %v744
  %v746 = vpop.f32.mrb[0].mxu0
  %v747 = vadd.f32 %v527, %v746
  %748 = vmatprep.mubr.bf16.mxu0 0
  %749 = vmatmul.mubr.bf16.gmra.mrb[0].mxu0 %v599
  %v750 = vpop.f32.mrb[0].mxu0
  %v751 = vadd.f32 %v523, %v750
  %v752 = vpop.f32.mrb[0].mxu0
  %v753 = vadd.f32 %v527, %v752
  %v754 = vpop.f32.mrb[0].mxu0
  %v755 = vadd.f32 %v523, %v754
  %v756 = vpop.f32.mrb[0].mxu0
  %v757 = vadd.f32 %v527, %v756
  %758 = vmatprep.mubr.bf16.mxu0 0
  %759 = vmatmul.mubr.bf16.gmra.mrb[0].mxu0 %v602
  %v760 = vpop.f32.mrb[0].mxu0
  %v761 = vadd.f32 %v523, %v760
  %v762 = vpop.f32.mrb[0].mxu0
  %v763 = vadd.f32 %v527, %v762
  %v764 = vpop.f32.mrb[0].mxu0
  %v765 = vadd.f32 %v523, %v764
  %v766 = vpop.f32.mrb[0].mxu0
  %v767 = vadd.f32 %v527, %v766
  %768 = vmatprep.mubr.bf16.mxu0 0
  %769 = vmatmul.mubr.bf16.gmra.mrb[0].mxu0 %v605
  %v770 = vpop.f32.mrb[0].mxu0
  %v771 = vadd.f32 %v523, %v770
  %v772 = vpop.f32.mrb[0].mxu0
  %v773 = vadd.f32 %v527, %v772
  %v774 = vpop.f32.mrb[0].mxu0
  %v775 = vadd.f32 %v523, %v774
  %v776 = vpop.f32.mrb[0].mxu0
  %v777 = vadd.f32 %v527, %v776
  %778 = vmatprep.mubr.bf16.mxu0 0
  %779 = vmatmul.mubr.bf16.gmra.mrb[0].mxu0 %v608
  %v780 = vpop.f32.mrb[0].mxu0
  %v781 = vadd.f32 %v523, %v780
  %v782 = vpop.f32.mrb[0].mxu0
  %v783 = vadd.f32 %v527, %v782
  %v784 = vpop.f32.mrb[0].mxu0
  %v785 = vadd.f32 %v523, %v784
  %v786 = vpop.f32.mrb[0].mxu0
  %v787 = vadd.f32 %v527, %v786
  %788 = vmatprep.mubr.bf16.mxu0 0
  %789 = vmatmul.mubr.bf16.gmra.mrb[0].mxu0 %v611
  %v790 = vpop.f32.mrb[0].mxu0
  %v791 = vadd.f32 %v523, %v790
  %v792 = vpop.f32.mrb[0].mxu0
  %v793 = vadd.f32 %v527, %v792
  %v794 = vpop.f32.mrb[0].mxu0
  %v795 = vadd.f32 %v523, %v794
  %v796 = vpop.f32.mrb[0].mxu0
  %v797 = vadd.f32 %v527, %v796
  %798 = vmatprep.mubr.bf16.mxu0 0
  %799 = vmatmul.mubr.bf16.gmra.mrb[0].mxu0 %v614
  %v800 = vpop.f32.mrb[0].mxu0
  %v801 = vadd.f32 %v523, %v800
  %v802 = vpop.f32.mrb[0].mxu0
  %v803 = vadd.f32 %v527, %v802
  %v804 = vpop.f32.mrb[0].mxu0
  %v805 = vadd.f32 %v523, %v804
  %v806 = vpop.f32.mrb[0].mxu0
  %v807 = vadd.f32 %v527, %v806
  %808 = vdwg.mxu0
  %809 = vmatprep.subr.bf16.mxu0 0
  %810 = vmatpush1.bf16.msra.mxu0 %v557
  %811 = vmatprep.subr.bf16.mxu0 0
  %812 = vmatpush1.bf16.msra.mxu0 %v560
  %813 = vmatprep.subr.bf16.mxu0 0
  %814 = vmatpush1.bf16.msra.mxu0 0
  %815 = vmatprep.subr.bf16.mxu0 0
  %816 = vmatpush1.bf16.msra.mxu0 0
  %817 = vmatprep.subr.bf16.mxu0 0
  %818 = vmatpush1.bf16.msra.mxu0 0
  %819 = vmatprep.subr.bf16.mxu0 0
  %820 = vmatpush1.bf16.msra.mxu0 0
  %821 = vmatprep.subr.bf16.mxu0 0
  %822 = vmatpush1.bf16.msra.mxu0 0
  %823 = vmatprep.subr.bf16.mxu0 0
  %824 = vmatpush1.bf16.msra.mxu0 0
  %825 = vmatprep.subr.bf16.mxu0 0
  %826 = vmatpush1.bf16.msra.mxu0 0
  %827 = vmatprep.subr.bf16.mxu0 0
  %828 = vmatpush1.bf16.msra.mxu0 0
  %829 = vmatprep.subr.bf16.mxu0 0
  %830 = vmatpush1.bf16.msra.mxu0 0
  %831 = vmatprep.subr.bf16.mxu0 0
  %832 = vmatpush1.bf16.msra.mxu0 0
  %833 = vmatprep.subr.bf16.mxu0 0
  %834 = vmatpush1.bf16.msra.mxu0 0
  %835 = vmatprep.subr.bf16.mxu0 0
  %836 = vmatpush1.bf16.msra.mxu0 0
  %837 = vmatprep.subr.bf16.mxu0 0
  %838 = vmatpush1.bf16.msra.mxu0 0
  %839 = vmatprep.subr.bf16.mxu0 0
  %840 = vmatpush1.bf16.msra.mxu0 0
  %841 = vmatprep.mubr.bf16.mxu0 0
  %842 = vmatmul.mubr.bf16.gmra.mrb[0].mxu0 %v569
  %v843 = vpop.f32.mrb[0].mxu0
  %v844 = vadd.f32 %v531, %v843
  %v845 = vpop.f32.mrb[0].mxu0
  %v846 = vpop.f32.mrb[0].mxu0
  %v847 = vadd.f32 %v531, %v846
  %v848 = vpop.f32.mrb[0].mxu0
  %849 = vmatprep.mubr.bf16.mxu0 0
  %850 = vmatmul.mubr.bf16.gmra.mrb[0].mxu0 %v572
  %v851 = vpop.f32.mrb[0].mxu0
  %v852 = vadd.f32 %v531, %v851
  %v853 = vpop.f32.mrb[0].mxu0
  %v854 = vpop.f32.mrb[0].mxu0
  %v855 = vadd.f32 %v531, %v854
  %v856 = vpop.f32.mrb[0].mxu0
  %857 = vmatprep.mubr.bf16.mxu0 0
  %858 = vmatmul.mubr.bf16.gmra.mrb[0].mxu0 %v575
  %v859 = vpop.f32.mrb[0].mxu0
  %v860 = vadd.f32 %v531, %v859
  %v861 = vpop.f32.mrb[0].mxu0
  %v862 = vpop.f32.mrb[0].mxu0
  %v863 = vadd.f32 %v531, %v862
  %v864 = vpop.f32.mrb[0].mxu0
  %865 = vmatprep.mubr.bf16.mxu0 0
  %866 = vmatmul.mubr.bf16.gmra.mrb[0].mxu0 %v578
  %v867 = vpop.f32.mrb[0].mxu0
  %v868 = vadd.f32 %v531, %v867
  %v869 = vpop.f32.mrb[0].mxu0
  %v870 = vpop.f32.mrb[0].mxu0
  %v871 = vadd.f32 %v531, %v870
  %v872 = vpop.f32.mrb[0].mxu0
  %873 = vmatprep.mubr.bf16.mxu0 0
  %874 = vmatmul.mubr.bf16.gmra.mrb[0].mxu0 %v581
  %v875 = vpop.f32.mrb[0].mxu0
  %v876 = vadd.f32 %v531, %v875
  %v877 = vpop.f32.mrb[0].mxu0
  %v878 = vpop.f32.mrb[0].mxu0
  %v879 = vadd.f32 %v531, %v878
  %v880 = vpop.f32.mrb[0].mxu0
  %881 = vmatprep.mubr.bf16.mxu0 0
  %882 = vmatmul.mubr.bf16.gmra.mrb[0].mxu0 %v584
  %v883 = vpop.f32.mrb[0].mxu0
  %v884 = vadd.f32 %v531, %v883
  %v885 = vpop.f32.mrb[0].mxu0
  %v886 = vpop.f32.mrb[0].mxu0
  %v887 = vadd.f32 %v531, %v886
  %v888 = vpop.f32.mrb[0].mxu0
  %889 = vmatprep.mubr.bf16.mxu0 0
  %890 = vmatmul.mubr.bf16.gmra.mrb[0].mxu0 %v587
  %v891 = vpop.f32.mrb[0].mxu0
  %v892 = vadd.f32 %v531, %v891
  %v893 = vpop.f32.mrb[0].mxu0
  %v894 = vpop.f32.mrb[0].mxu0
  %v895 = vadd.f32 %v531, %v894
  %v896 = vpop.f32.mrb[0].mxu0
  %897 = vmatprep.mubr.bf16.mxu0 0
  %898 = vmatmul.mubr.bf16.gmra.mrb[0].mxu0 %v590
  %v899 = vpop.f32.mrb[0].mxu0
  %v900 = vadd.f32 %v531, %v899
  %v901 = vpop.f32.mrb[0].mxu0
  %v902 = vpop.f32.mrb[0].mxu0
  %v903 = vadd.f32 %v531, %v902
  %v904 = vpop.f32.mrb[0].mxu0
  %905 = vmatprep.mubr.bf16.mxu0 0
  %906 = vmatmul.mubr.bf16.gmra.mrb[0].mxu0 %v593
  %v907 = vpop.f32.mrb[0].mxu0
  %v908 = vadd.f32 %v531, %v907
  %v909 = vpop.f32.mrb[0].mxu0
  %v910 = vpop.f32.mrb[0].mxu0
  %v911 = vadd.f32 %v531, %v910
  %v912 = vpop.f32.mrb[0].mxu0
  %913 = vmatprep.mubr.bf16.mxu0 0
  %914 = vmatmul.mubr.bf16.gmra.mrb[0].mxu0 %v596
  %v915 = vpop.f32.mrb[0].mxu0
  %v916 = vadd.f32 %v531, %v915
  %v917 = vpop.f32.mrb[0].mxu0
  %v918 = vpop.f32.mrb[0].mxu0
  %v919 = vadd.f32 %v531, %v918
  %v920 = vpop.f32.mrb[0].mxu0
  %921 = vmatprep.mubr.bf16.mxu0 0
  %922 = vmatmul.mubr.bf16.gmra.mrb[0].mxu0 %v599
  %v923 = vpop.f32.mrb[0].mxu0
  %v924 = vadd.f32 %v531, %v923
  %v925 = vpop.f32.mrb[0].mxu0
  %v926 = vpop.f32.mrb[0].mxu0
  %v927 = vadd.f32 %v531, %v926
  %v928 = vpop.f32.mrb[0].mxu0
  %929 = vmatprep.mubr.bf16.mxu0 0
  %930 = vmatmul.mubr.bf16.gmra.mrb[0].mxu0 %v602
  %v931 = vpop.f32.mrb[0].mxu0
  %v932 = vadd.f32 %v531, %v931
  %v933 = vpop.f32.mrb[0].mxu0
  %v934 = vpop.f32.mrb[0].mxu0
  %v935 = vadd.f32 %v531, %v934
  %v936 = vpop.f32.mrb[0].mxu0
  %937 = vmatprep.mubr.bf16.mxu0 0
  %938 = vmatmul.mubr.bf16.gmra.mrb[0].mxu0 %v605
  %v939 = vpop.f32.mrb[0].mxu0
  %v940 = vadd.f32 %v531, %v939
  %v941 = vpop.f32.mrb[0].mxu0
  %v942 = vpop.f32.mrb[0].mxu0
  %v943 = vadd.f32 %v531, %v942
  %v944 = vpop.f32.mrb[0].mxu0
  %945 = vmatprep.mubr.bf16.mxu0 0
  %946 = vmatmul.mubr.bf16.gmra.mrb[0].mxu0 %v608
  %v947 = vpop.f32.mrb[0].mxu0
  %v948 = vadd.f32 %v531, %v947
  %v949 = vpop.f32.mrb[0].mxu0
  %v950 = vpop.f32.mrb[0].mxu0
  %v951 = vadd.f32 %v531, %v950
  %v952 = vpop.f32.mrb[0].mxu0
  %953 = vmatprep.mubr.bf16.mxu0 0
  %954 = vmatmul.mubr.bf16.gmra.mrb[0].mxu0 %v611
  %v955 = vpop.f32.mrb[0].mxu0
  %v956 = vadd.f32 %v531, %v955
  %v957 = vpop.f32.mrb[0].mxu0
  %v958 = vpop.f32.mrb[0].mxu0
  %v959 = vadd.f32 %v531, %v958
  %v960 = vpop.f32.mrb[0].mxu0
  %961 = vmatprep.mubr.bf16.mxu0 0
  %962 = vmatmul.mubr.bf16.gmra.mrb[0].mxu0 %v614
  %v963 = vpop.f32.mrb[0].mxu0
  %v964 = vadd.f32 %v531, %v963
  %v965 = vpop.f32.mrb[0].mxu0
  %v966 = vpop.f32.mrb[0].mxu0
  %v967 = vadd.f32 %v531, %v966
  %v968 = vpop.f32.mrb[0].mxu0
  %969 = vdwg.mxu0
  %v970 = vpack.c.bf16 %v655, %v651
  %v971 = vpack.c.bf16 %v657, %v653
  %v972 = vpack.c.bf16 %v847, %v844
  %v973 = vpack.c.bf16 %v665, %v661
  %v974 = vpack.c.bf16 %v667, %v663
  %v975 = vpack.c.bf16 %v855, %v852
  %v976 = vpack.c.bf16 %v675, %v671
  %v977 = vpack.c.bf16 %v677, %v673
  %v978 = vpack.c.bf16 %v863, %v860
  %v979 = vpack.c.bf16 %v685, %v681
  %v980 = vpack.c.bf16 %v687, %v683
  %v981 = vpack.c.bf16 %v871, %v868
  %v982 = vpack.c.bf16 %v695, %v691
  %v983 = vpack.c.bf16 %v697, %v693
  %v984 = vpack.c.bf16 %v879, %v876
  %v985 = vpack.c.bf16 %v705, %v701
  %v986 = vpack.c.bf16 %v707, %v703
  %v987 = vpack.c.bf16 %v887, %v884
  %v988 = vpack.c.bf16 %v715, %v711
  %v989 = vpack.c.bf16 %v717, %v713
  %v990 = vpack.c.bf16 %v895, %v892
  %v991 = vpack.c.bf16 %v725, %v721
  %v992 = vpack.c.bf16 %v727, %v723
  %v993 = vpack.c.bf16 %v903, %v900
  %v994 = vpack.c.bf16 %v735, %v731
  %v995 = vpack.c.bf16 %v737, %v733
  %v996 = vpack.c.bf16 %v911, %v908
  %v997 = vpack.c.bf16 %v745, %v741
  %v998 = vpack.c.bf16 %v747, %v743
  %v999 = vpack.c.bf16 %v919, %v916
  %v1000 = vpack.c.bf16 %v755, %v751
  %v1001 = vpack.c.bf16 %v757, %v753
  %v1002 = vpack.c.bf16 %v927, %v924
  %v1003 = vpack.c.bf16 %v765, %v761
  %v1004 = vpack.c.bf16 %v767, %v763
  %v1005 = vpack.c.bf16 %v935, %v932
  %v1006 = vpack.c.bf16 %v775, %v771
  %v1007 = vpack.c.bf16 %v777, %v773
  %v1008 = vpack.c.bf16 %v943, %v940
  %v1009 = vpack.c.bf16 %v785, %v781
  %v1010 = vpack.c.bf16 %v787, %v783
  %v1011 = vpack.c.bf16 %v951, %v948
  %v1012 = vpack.c.bf16 %v795, %v791
  %v1013 = vpack.c.bf16 %v797, %v793
  %v1014 = vpack.c.bf16 %v959, %v956
  %v1015 = vpack.c.bf16 %v805, %v801
  %v1016 = vpack.c.bf16 %v807, %v803
  %v1017 = vpack.c.bf16 %v967, %v964
  %v1066 = vunpack.c.l.b16 %v970
  %v1067 = vunpack.c.l.b16 %v971
  %v1068 = vunpack.c.l.b16 %v972
  %v1069 = vunpack.c.h.b16 %v970
  %v1070 = vunpack.c.h.b16 %v971
  %v1071 = vunpack.c.h.b16 %v972
  %v1072 = vunpack.c.l.b16 %v973
  %v1073 = vunpack.c.l.b16 %v974
  %v1074 = vunpack.c.l.b16 %v975
  %v1075 = vunpack.c.h.b16 %v973
  %v1076 = vunpack.c.h.b16 %v974
  %v1077 = vunpack.c.h.b16 %v975
  %v1078 = vunpack.c.l.b16 %v976
  %v1079 = vunpack.c.l.b16 %v977
  %v1080 = vunpack.c.l.b16 %v978
  %v1081 = vunpack.c.h.b16 %v976
  %v1082 = vunpack.c.h.b16 %v977
  %v1083 = vunpack.c.h.b16 %v978
  %v1084 = vunpack.c.l.b16 %v979
  %v1085 = vunpack.c.l.b16 %v980
  %v1086 = vunpack.c.l.b16 %v981
  %v1087 = vunpack.c.h.b16 %v979
  %v1088 = vunpack.c.h.b16 %v980
  %v1089 = vunpack.c.h.b16 %v981
  %v1090 = vunpack.c.l.b16 %v982
  %v1091 = vunpack.c.l.b16 %v983
  %v1092 = vunpack.c.l.b16 %v984
  %v1093 = vunpack.c.h.b16 %v982
  %v1094 = vunpack.c.h.b16 %v983
  %v1095 = vunpack.c.h.b16 %v984
  %v1096 = vunpack.c.l.b16 %v985
  %v1097 = vunpack.c.l.b16 %v986
  %v1098 = vunpack.c.l.b16 %v987
  %v1099 = vunpack.c.h.b16 %v985
  %v1100 = vunpack.c.h.b16 %v986
  %v1101 = vunpack.c.h.b16 %v987
  %v1102 = vunpack.c.l.b16 %v988
  %v1103 = vunpack.c.l.b16 %v989
  %v1104 = vunpack.c.l.b16 %v990
  %v1105 = vunpack.c.h.b16 %v988
  %v1106 = vunpack.c.h.b16 %v989
  %v1107 = vunpack.c.h.b16 %v990
  %v1108 = vunpack.c.l.b16 %v991
  %v1109 = vunpack.c.l.b16 %v992
  %v1110 = vunpack.c.l.b16 %v993
  %v1111 = vunpack.c.h.b16 %v991
  %v1112 = vunpack.c.h.b16 %v992
  %v1113 = vunpack.c.h.b16 %v993
  %v1114 = vunpack.c.l.b16 %v994
  %v1115 = vunpack.c.l.b16 %v995
  %v1116 = vunpack.c.l.b16 %v996
  %v1117 = vunpack.c.h.b16 %v994
  %v1118 = vunpack.c.h.b16 %v995
  %v1119 = vunpack.c.h.b16 %v996
  %v1120 = vunpack.c.l.b16 %v997
  %v1121 = vunpack.c.l.b16 %v998
  %v1122 = vunpack.c.l.b16 %v999
  %v1123 = vunpack.c.h.b16 %v997
  %v1124 = vunpack.c.h.b16 %v998
  %v1125 = vunpack.c.h.b16 %v999
  %v1126 = vunpack.c.l.b16 %v1000
  %v1127 = vunpack.c.l.b16 %v1001
  %v1128 = vunpack.c.l.b16 %v1002
  %v1129 = vunpack.c.h.b16 %v1000
  %v1130 = vunpack.c.h.b16 %v1001
  %v1131 = vunpack.c.h.b16 %v1002
  %v1132 = vunpack.c.l.b16 %v1003
  %v1133 = vunpack.c.l.b16 %v1004
  %v1134 = vunpack.c.l.b16 %v1005
  %v1135 = vunpack.c.h.b16 %v1003
  %v1136 = vunpack.c.h.b16 %v1004
  %v1137 = vunpack.c.h.b16 %v1005
  %v1138 = vunpack.c.l.b16 %v1006
  %v1139 = vunpack.c.l.b16 %v1007
  %v1140 = vunpack.c.l.b16 %v1008
  %v1141 = vunpack.c.h.b16 %v1006
  %v1142 = vunpack.c.h.b16 %v1007
  %v1143 = vunpack.c.h.b16 %v1008
  %v1144 = vunpack.c.l.b16 %v1009
  %v1145 = vunpack.c.l.b16 %v1010
  %v1146 = vunpack.c.l.b16 %v1011
  %v1147 = vunpack.c.h.b16 %v1009
  %v1148 = vunpack.c.h.b16 %v1010
  %v1149 = vunpack.c.h.b16 %v1011
  %v1150 = vunpack.c.l.b16 %v1012
  %v1151 = vunpack.c.l.b16 %v1013
  %v1152 = vunpack.c.l.b16 %v1014
  %v1153 = vunpack.c.h.b16 %v1012
  %v1154 = vunpack.c.h.b16 %v1013
  %v1155 = vunpack.c.h.b16 %v1014
  %v1156 = vunpack.c.l.b16 %v1015
  %v1157 = vunpack.c.l.b16 %v1016
  %v1158 = vunpack.c.l.b16 %v1017
  %v1159 = vunpack.c.h.b16 %v1015
  %v1160 = vunpack.c.h.b16 %v1016
  %v1161 = vunpack.c.h.b16 %v1017
  %v1162 = vpack.c.b16 %v1067, %v1066
  %v1163 = vpack.c.b16 %v1068, %v1068
  %v1164 = vpack.c.b16 %v1070, %v1069
  %v1165 = vpack.c.b16 %v1071, %v1071
  %v1166 = vpack.c.b16 %v1073, %v1072
  %v1167 = vpack.c.b16 %v1074, %v1074
  %v1168 = vpack.c.b16 %v1076, %v1075
  %v1169 = vpack.c.b16 %v1077, %v1077
  %v1170 = vpack.c.b16 %v1079, %v1078
  %v1171 = vpack.c.b16 %v1080, %v1080
  %v1172 = vpack.c.b16 %v1082, %v1081
  %v1173 = vpack.c.b16 %v1083, %v1083
  %v1174 = vpack.c.b16 %v1085, %v1084
  %v1175 = vpack.c.b16 %v1086, %v1086
  %v1176 = vpack.c.b16 %v1088, %v1087
  %v1177 = vpack.c.b16 %v1089, %v1089
  %v1178 = vpack.c.b16 %v1091, %v1090
  %v1179 = vpack.c.b16 %v1092, %v1092
  %v1180 = vpack.c.b16 %v1094, %v1093
  %v1181 = vpack.c.b16 %v1095, %v1095
  %v1182 = vpack.c.b16 %v1097, %v1096
  %v1183 = vpack.c.b16 %v1098, %v1098
  %v1184 = vpack.c.b16 %v1100, %v1099
  %v1185 = vpack.c.b16 %v1101, %v1101
  %v1186 = vpack.c.b16 %v1103, %v1102
  %v1187 = vpack.c.b16 %v1104, %v1104
  %v1188 = vpack.c.b16 %v1106, %v1105
  %v1189 = vpack.c.b16 %v1107, %v1107
  %v1190 = vpack.c.b16 %v1109, %v1108
  %v1191 = vpack.c.b16 %v1110, %v1110
  %v1192 = vpack.c.b16 %v1112, %v1111
  %v1193 = vpack.c.b16 %v1113, %v1113
  %v1194 = vpack.c.b16 %v1115, %v1114
  %v1195 = vpack.c.b16 %v1116, %v1116
  %v1196 = vpack.c.b16 %v1118, %v1117
  %v1197 = vpack.c.b16 %v1119, %v1119
  %v1198 = vpack.c.b16 %v1121, %v1120
  %v1199 = vpack.c.b16 %v1122, %v1122
  %v1200 = vpack.c.b16 %v1124, %v1123
  %v1201 = vpack.c.b16 %v1125, %v1125
  %v1202 = vpack.c.b16 %v1127, %v1126
  %v1203 = vpack.c.b16 %v1128, %v1128
  %v1204 = vpack.c.b16 %v1130, %v1129
  %v1205 = vpack.c.b16 %v1131, %v1131
  %v1206 = vpack.c.b16 %v1133, %v1132
  %v1207 = vpack.c.b16 %v1134, %v1134
  %v1208 = vpack.c.b16 %v1136, %v1135
  %v1209 = vpack.c.b16 %v1137, %v1137
  %v1210 = vpack.c.b16 %v1139, %v1138
  %v1211 = vpack.c.b16 %v1140, %v1140
  %v1212 = vpack.c.b16 %v1142, %v1141
  %v1213 = vpack.c.b16 %v1143, %v1143
  %v1214 = vpack.c.b16 %v1145, %v1144
  %v1215 = vpack.c.b16 %v1146, %v1146
  %v1216 = vpack.c.b16 %v1148, %v1147
  %v1217 = vpack.c.b16 %v1149, %v1149
  %v1218 = vpack.c.b16 %v1151, %v1150
  %v1219 = vpack.c.b16 %v1152, %v1152
  %v1220 = vpack.c.b16 %v1154, %v1153
  %v1221 = vpack.c.b16 %v1155, %v1155
  %v1222 = vpack.c.b16 %v1157, %v1156
  %v1223 = vpack.c.b16 %v1158, %v1158
  %v1224 = vpack.c.b16 %v1160, %v1159
  %v1225 = vpack.c.b16 %v1161, %v1161
  %1290 = vst [vmem:[%s5] sm:$0xff] %v1162
  %vm1291 = vcmask 257024
  %1292 = vst.msk [vmem:[%s5 + $0x8] sm:$0xf] %vm1291, %v1163
  %1293 = vst [vmem:[%s5 + $0xc] sm:$0xff] %v1164
  %1294 = vst.msk [vmem:[%s5 + $0x14] sm:$0xf] %vm1291, %v1165
  %1295 = vst [vmem:[%s5 + $0x18] sm:$0xff] %v1166
  %1296 = vst.msk [vmem:[%s5 + $0x20] sm:$0xf] %vm1291, %v1167
  %1297 = vst [vmem:[%s5 + $0x24] sm:$0xff] %v1168
  %1298 = vst.msk [vmem:[%s5 + $0x2c] sm:$0xf] %vm1291, %v1169
  %1299 = vst [vmem:[%s5 + $0x30] sm:$0xff] %v1170
  %1300 = vst.msk [vmem:[%s5 + $0x38] sm:$0xf] %vm1291, %v1171
  %1301 = vst [vmem:[%s5 + $0x3c] sm:$0xff] %v1172
  %1302 = vst.msk [vmem:[%s5 + $0x44] sm:$0xf] %vm1291, %v1173
  %1303 = vst [vmem:[%s5 + $0x48] sm:$0xff] %v1174
  %1304 = vst.msk [vmem:[%s5 + $0x50] sm:$0xf] %vm1291, %v1175
  %1305 = vst [vmem:[%s5 + $0x54] sm:$0xff] %v1176
  %1306 = vst.msk [vmem:[%s5 + $0x5c] sm:$0xf] %vm1291, %v1177
  %1307 = vst [vmem:[%s5 + $0x60] sm:$0xff] %v1178
  %1308 = vst.msk [vmem:[%s5 + $0x68] sm:$0xf] %vm1291, %v1179
  %1309 = vst [vmem:[%s5 + $0x6c] sm:$0xff] %v1180
  %1310 = vst.msk [vmem:[%s5 + $0x74] sm:$0xf] %vm1291, %v1181
  %1311 = vst [vmem:[%s5 + $0x78] sm:$0xff] %v1182
  %1312 = vst.msk [vmem:[%s5 + $0x80] sm:$0xf] %vm1291, %v1183
  %1313 = vst [vmem:[%s5 + $0x84] sm:$0xff] %v1184
  %1314 = vst.msk [vmem:[%s5 + $0x8c] sm:$0xf] %vm1291, %v1185
  %1315 = vst [vmem:[%s5 + $0x90] sm:$0xff] %v1186
  %1316 = vst.msk [vmem:[%s5 + $0x98] sm:$0xf] %vm1291, %v1187
  %1317 = vst [vmem:[%s5 + $0x9c] sm:$0xff] %v1188
  %1318 = vst.msk [vmem:[%s5 + $0xa4] sm:$0xf] %vm1291, %v1189
  %1319 = vst [vmem:[%s5 + $0xa8] sm:$0xff] %v1190
  %1320 = vst.msk [vmem:[%s5 + $0xb0] sm:$0xf] %vm1291, %v1191
  %1321 = vst [vmem:[%s5 + $0xb4] sm:$0xff] %v1192
  %1322 = vst.msk [vmem:[%s5 + $0xbc] sm:$0xf] %vm1291, %v1193
  %1323 = vst [vmem:[%s5 + $0xc0] sm:$0xff] %v1194
  %1324 = vst.msk [vmem:[%s5 + $0xc8] sm:$0xf] %vm1291, %v1195
  %1325 = vst [vmem:[%s5 + $0xcc] sm:$0xff] %v1196
  %1326 = vst.msk [vmem:[%s5 + $0xd4] sm:$0xf] %vm1291, %v1197
  %1327 = vst [vmem:[%s5 + $0xd8] sm:$0xff] %v1198
  %1328 = vst.msk [vmem:[%s5 + $0xe0] sm:$0xf] %vm1291, %v1199
  %1329 = vst [vmem:[%s5 + $0xe4] sm:$0xff] %v1200
  %1330 = vst.msk [vmem:[%s5 + $0xec] sm:$0xf] %vm1291, %v1201
  %1331 = vst [vmem:[%s5 + $0xf0] sm:$0xff] %v1202
  %1332 = vst.msk [vmem:[%s5 + $0xf8] sm:$0xf] %vm1291, %v1203
  %1333 = vst [vmem:[%s5 + $0xfc] sm:$0xff] %v1204
  %1334 = vst.msk [vmem:[%s5 + $0x104] sm:$0xf] %vm1291, %v1205
  %1335 = vst [vmem:[%s5 + $0x108] sm:$0xff] %v1206
  %1336 = vst.msk [vmem:[%s5 + $0x110] sm:$0xf] %vm1291, %v1207
  %1337 = vst [vmem:[%s5 + $0x114] sm:$0xff] %v1208
  %1338 = vst.msk [vmem:[%s5 + $0x11c] sm:$0xf] %vm1291, %v1209
  %1339 = vst [vmem:[%s5 + $0x120] sm:$0xff] %v1210
  %1340 = vst.msk [vmem:[%s5 + $0x128] sm:$0xf] %vm1291, %v1211
  %1341 = vst [vmem:[%s5 + $0x12c] sm:$0xff] %v1212
  %1342 = vst.msk [vmem:[%s5 + $0x134] sm:$0xf] %vm1291, %v1213
  %1343 = vst [vmem:[%s5 + $0x138] sm:$0xff] %v1214
  %1344 = vst.msk [vmem:[%s5 + $0x140] sm:$0xf] %vm1291, %v1215
  %1345 = vst [vmem:[%s5 + $0x144] sm:$0xff] %v1216
  %1346 = vst.msk [vmem:[%s5 + $0x14c] sm:$0xf] %vm1291, %v1217
  %1347 = vst [vmem:[%s5 + $0x150] sm:$0xff] %v1218
  %1348 = vst.msk [vmem:[%s5 + $0x158] sm:$0xf] %vm1291, %v1219
  %1349 = vst [vmem:[%s5 + $0x15c] sm:$0xff] %v1220
  %1350 = vst.msk [vmem:[%s5 + $0x164] sm:$0xf] %vm1291, %v1221
  %1351 = vst [vmem:[%s5 + $0x168] sm:$0xff] %v1222
  %1352 = vst.msk [vmem:[%s5 + $0x170] sm:$0xf] %vm1291, %v1223
  %1353 = vst [vmem:[%s5 + $0x174] sm:$0xff] %v1224
  %1354 = vst.msk [vmem:[%s5 + $0x17c] sm:$0xf] %vm1291, %v1225
  // Predicated region
  $region22: #{tpu_custom_call.1} parent=0 // pred_check
    _
  $region23: #{tpu_custom_call.1} parent=0 // pred_check_branch
    %1356 = sbr.rel (0) target = $region25
  $region24: #{tpu_custom_call.1} parent=0 // pred_region
    _
  $region25: #{tpu_custom_call.1} parent=0 // pred_fallthru
    _
  // Predicated region
  $region26: #{tpu_custom_call.1} parent=0 // pred_check
    _
  $region27: #{tpu_custom_call.1} parent=0 // pred_check_branch
    %1358 = sbr.rel (0) target = $region29
  $region28: #{tpu_custom_call.1} parent=0 // pred_region
    _
  $region29: #{tpu_custom_call.1} parent=0 // pred_fallthru
    _

</llo_original>
